<compile_context>
chip_gen: v7x
topology: tpu7x:2x2x1
jax: 0.10.0
libtpu: 0.0.40
codegen_flags: <defaults>
</compile_context>

<pallas_src>
import functools
import math

import jax
import jax.numpy as jnp
from jax.experimental import pallas as pl
from jax.experimental.pallas import tpu as pltpu

# One-hot @ table on the MXU only for small *float* vocabularies.
_ONE_HOT_MAX_VOCAB = 512
# Request single-buffering of the resident table only when it is big enough for
# the duplicate buffer to matter (small tables keep the default 2-deep path).
_TABLE_SINGLE_BUFFER_MIN_BYTES = 4 << 20
# Max token ids scalar-prefetched into SMEM per pallas_call (128 KiB of int32).
_MAX_PREFETCH_TOKENS = 32 * 1024
# Conservative fallback (v7x has 64 MiB per TensorCore).
_DEFAULT_VMEM_CAPACITY = 64 << 20


def _round_up(x, m):
    return (x + m - 1) // m * m


def _sublane_multiple(dtype):
    # f32 -> 8, bf16 -> 16, int8/fp8 -> 32 (sub-32-bit dtypes pack along sublanes).
    return max(8, 32 // jnp.dtype(dtype).itemsize)


def _vmem_capacity_bytes():
    try:
        return int(pltpu.get_tpu_info().vmem_capacity_bytes)
    except Exception:
        return _DEFAULT_VMEM_CAPACITY


# ---------------------------------------------------------------------------
# Path A: small float vocab, table resident in VMEM -> one-hot gather on MXU.
# ---------------------------------------------------------------------------
def _embed_onehot_kernel(ids_ref, table_ref, out_ref, *, scale, vocab):
    # ids_ref:   (block_t, 1) int32 token ids for this token block (VMEM)
    # table_ref: (vocab, d_model) resident embedding table (VMEM)
    # out_ref:   (block_t, d_model) output tile
    block_t = out_ref.shape[0]
    ids_col = jnp.clip(ids_ref[...], 0, vocab - 1)                    # (block_t, 1)
    iota = jax.lax.broadcasted_iota(jnp.int32, (block_t, vocab), 1)
    one_hot = (ids_col == iota).astype(table_ref.dtype)               # exact 0/1
    acc = jnp.dot(one_hot, table_ref[...], preferred_element_type=jnp.float32)
    # Scale rides on the MXU f32 accumulator that exists anyway (no extra
    # materialized f32 copy); single VPU pass, hidden under the DMA writeback.
    out_ref[...] = (acc * scale).astype(out_ref.dtype)


# ---------------------------------------------------------------------------
# Path B: larger vocab, table still resident in VMEM -> explicit row gather.
# ---------------------------------------------------------------------------
def _embed_resident_gather_kernel(ids_smem, table_ref, out_ref, *,
                                  scale, vocab, block_t, group):
    # ids_smem:  (chunk_tokens,) int32 ids in SMEM (scalar prefetch)
    # table_ref: (vocab, d_model) resident embedding table (VMEM)
    # out_ref:   (block_t, d_model) output tile
    base = pl.program_id(0) * block_t

    # Gather `group` rows at a time so the stores are sublane-aligned and
    # unmasked; each row load is a plain dynamic-offset vld from the resident
    # table (no jnp.take / dynamic_gather dependency).
    @pl.loop(0, block_t // group)
    def _(g):
        start = base + g * group
        rows = []
        for r in range(group):                       # static unroll
            tok = jnp.clip(ids_smem[start + r], 0, vocab - 1)
            rows.append(table_ref[pl.ds(tok, 1), :])
        tile = jnp.concatenate(rows, axis=0)         # (group, d_model), native dtype
        off = pl.multiple_of(g * group, group)
        # Scale applied in the table's native dtype (no f32 intermediate).
        out_ref[pl.ds(off, group), :] = (tile * scale).astype(out_ref.dtype)


# ---------------------------------------------------------------------------
# Path C: table too large for VMEM -> HBM row-DMA gather, double-buffered
#         across grid steps (issue block i+1 while storing block i).
# ---------------------------------------------------------------------------
def _embed_hbm_gather_kernel(ids_smem, table_hbm, out_ref, rows_vmem, sems, *,
                             scale, vocab, block_t, num_blocks):
    # ids_smem:  (chunk_tokens,) int32 ids in SMEM (scalar prefetch)
    # table_hbm: (vocab, d_model) embedding table left in HBM (pl.ANY)
    # out_ref:   (block_t, d_model) output tile (writeback pipelined by BlockSpec)
    # rows_vmem: (2, block_t, d_model) VMEM scratch, one slot per in-flight block
    # sems:      (2,) DMA semaphores, one per slot
    i = pl.program_id(0)
    slot = i % 2

    def issue_rows(block_idx, s):
        base = block_idx * block_t

        @pl.loop(0, block_t)
        def _(t):
            tok = jnp.clip(ids_smem[base + t], 0, vocab - 1)
            pltpu.make_async_copy(table_hbm.at[pl.ds(tok, 1), :],
                                  rows_vmem.at[s, pl.ds(t, 1), :],
                                  sems.at[s]).start()

    # Prime: first grid step issues its own block's row DMAs.
    @pl.when(i == 0)
    def _():
        issue_rows(0, 0)

    # Overlap: issue NEXT block's row DMAs into the other slot before waiting,
    # so the gather of block i+1 hides behind the scale/store of block i.
    @pl.when(i + 1 < num_blocks)
    def _():
        issue_rows(i + 1, 1 - slot)

    # Aggregate wait: every row copy into this slot is identical in size and
    # signals sems[slot] with its byte count, so one wait descriptor sized for
    # the full (block_t, d_model) tile covers all block_t row copies.
    pltpu.make_async_copy(rows_vmem.at[slot], rows_vmem.at[slot], sems.at[slot]).wait()

    # Scale in the table's native dtype; store the lane-dense tile.
    out_ref[...] = (rows_vmem[slot] * scale).astype(out_ref.dtype)


def word_embedding(x, emb_table, *, block_tokens=None):
    """x: int token ids, any shape; emb_table: (vocab, d_model).

    Returns emb_table[x] * sqrt(d_model) with shape x.shape + (d_model,).
    """
    orig_shape = x.shape
    vocab, d_model = emb_table.shape
    dtype = emb_table.dtype
    itemsize = jnp.dtype(dtype).itemsize
    row_bytes = d_model * itemsize
    scale = math.sqrt(d_model)
    is_float_table = jnp.issubdtype(dtype, jnp.floating)

    n = 1
    for s in orig_shape:
        n *= int(s)
    n = max(n, 1)

    # ------------------ generation-aware sizing ------------------
    vmem_cap = _vmem_capacity_bytes()          # 128 MiB on v5e/v6e, 64 MiB/TC on v7x
    sublane = _sublane_multiple(dtype)

    if block_tokens is None:
        # ~1 MiB output tiles on 64 MiB parts, ~2 MiB on 128 MiB parts.
        target_tile_bytes = (1 << 20) if vmem_cap <= (64 << 20) else (2 << 20)
        block_tokens = max(sublane, min(2048, target_tile_bytes // max(row_bytes, 1)))
    block_t = _round_up(min(int(block_tokens), n), sublane)
    n_padded = _round_up(n, block_t)
    num_blocks = n_padded // block_t

    ids = x.reshape(n).astype(jnp.int32)
    if n_padded != n:
        ids = jnp.pad(ids, (0, n_padded - n))

    table_bytes = vocab * row_bytes
    out_tile_bytes = block_t * row_bytes

    # Resident table buffer count: constant index_map -> single buffer for big
    # tables; small tables keep the default double-buffered path.
    table_buffers = 1 if table_bytes >= _TABLE_SINGLE_BUFFER_MIN_BYTES else 2
    table_spec_kwargs = (
        dict(pipeline_mode=pl.Buffered(buffer_count=1)) if table_buffers == 1 else {})

    onehot_ok = is_float_table and vocab <= _ONE_HOT_MAX_VOCAB
    onehot_bytes = (block_t * vocab * itemsize + block_t * d_model * 4) if onehot_ok else 0
    resident_bytes = (table_buffers * table_bytes          # resident table buffers
                      + 2 * out_tile_bytes                 # double-buffered output tiles
                      + 2 * block_t * 4                    # ids tiles / SMEM copies
                      + onehot_bytes                       # one-hot + f32 accumulator
                      + (2 << 20))                         # margin for internal scratch

    resident_budget = max(vmem_cap - (20 << 20), 16 << 20)     # per-TensorCore budget
    vmem_limit_cap = max(vmem_cap - (12 << 20), 32 << 20)      # ~52 MiB on v7x
    use_resident = resident_bytes <= resident_budget

    # ------------------ helpers ------------------
    def run_chunked(call_chunk):
        # Bound SMEM scalar prefetch: at most _MAX_PREFETCH_TOKENS ids per call.
        max_chunk = max(block_t, (_MAX_PREFETCH_TOKENS // block_t) * block_t)
        if n_padded <= max_chunk:
            return call_chunk(ids)
        total = _round_up(n_padded, max_chunk)
        ids_full = jnp.pad(ids, (0, total - n_padded)) if total != n_padded else ids
        outs = [call_chunk(ids_full[c * max_chunk:(c + 1) * max_chunk])
                for c in range(total // max_chunk)]
        return jnp.concatenate(outs, axis=0)

    if use_resident and onehot_ok:
        # ---------------- Path A: resident table, one-hot MXU gather ----------------
        vmem_limit = int(min(max(resident_bytes + (6 << 20), 32 << 20), vmem_limit_cap))
        cost = pl.CostEstimate(
            flops=2 * n_padded * vocab * d_model, transcendentals=0,
            bytes_accessed=table_bytes + n_padded * (4 + row_bytes))
        out_padded = pl.pallas_call(
            functools.partial(_embed_onehot_kernel, scale=scale, vocab=vocab),
            out_shape=jax.ShapeDtypeStruct((n_padded, d_model), dtype),
            grid=(num_blocks,),
            in_specs=[
                pl.BlockSpec((block_t, 1), lambda i: (i, 0)),
                # Same block index every step -> table resident, DMA'd once.
                pl.BlockSpec((vocab, d_model), lambda i: (0, 0), **table_spec_kwargs),
            ],
            out_specs=pl.BlockSpec((block_t, d_model), lambda i: (i, 0)),
            compiler_params=pltpu.CompilerParams(
                dimension_semantics=("parallel",),   # token blocks are independent
                vmem_limit_bytes=vmem_limit),
            cost_estimate=cost,
        )(ids.reshape(n_padded, 1), emb_table)

    elif use_resident:
        # ---------------- Path B: resident table, row-slice gather ----------------
        vmem_limit = int(min(max(resident_bytes + (6 << 20), 32 << 20), vmem_limit_cap))

        def call_chunk(ids_chunk):
            nt = ids_chunk.shape[0]
            nb = nt // block_t
            cost = pl.CostEstimate(
                flops=nt * d_model, transcendentals=0,
                bytes_accessed=table_bytes + nt * (4 + row_bytes))
            return pl.pallas_call(
                functools.partial(_embed_resident_gather_kernel, scale=scale,
                                  vocab=vocab, block_t=block_t, group=sublane),
                out_shape=jax.ShapeDtypeStruct((nt, d_model), dtype),
                grid_spec=pltpu.PrefetchScalarGridSpec(
                    num_scalar_prefetch=1,              # chunk ids land in SMEM
                    grid=(nb,),
                    in_specs=[pl.BlockSpec((vocab, d_model),
                                           lambda i, ids_ref: (0, 0),
                                           **table_spec_kwargs)],
                    out_specs=pl.BlockSpec((block_t, d_model),
                                           lambda i, ids_ref: (i, 0)),
                ),
                compiler_params=pltpu.CompilerParams(
                    dimension_semantics=("parallel",),
                    vmem_limit_bytes=vmem_limit),
                cost_estimate=cost,
            )(ids_chunk, emb_table)

        out_padded = run_chunked(call_chunk)

    else:
        # ---------------- Path C: HBM table, manual row-DMA gather ----------------
        vmem_limit = int(min(max(4 * out_tile_bytes + (8 << 20), 32 << 20),
                             vmem_limit_cap))

        def call_chunk(ids_chunk):
            nt = ids_chunk.shape[0]
            nb = nt // block_t
            # Bytes reflect gathered rows + output write, not the full table.
            cost = pl.CostEstimate(
                flops=nt * d_model, transcendentals=0,
                bytes_accessed=nt * (4 + 2 * row_bytes))
            return pl.pallas_call(
                functools.partial(_embed_hbm_gather_kernel, scale=scale, vocab=vocab,
                                  block_t=block_t, num_blocks=nb),
                out_shape=jax.ShapeDtypeStruct((nt, d_model), dtype),
                grid_spec=pltpu.PrefetchScalarGridSpec(
                    num_scalar_prefetch=1,              # chunk ids land in SMEM
                    grid=(nb,),
                    in_specs=[pl.BlockSpec(memory_space=pl.ANY)],   # table stays in HBM
                    out_specs=pl.BlockSpec((block_t, d_model),
                                           lambda i, ids_ref: (i, 0)),
                    scratch_shapes=[
                        pltpu.VMEM((2, block_t, d_model), dtype),
                        pltpu.SemaphoreType.DMA((2,)),
                    ],
                ),
                compiler_params=pltpu.CompilerParams(
                    # Cross-step double-buffering carries state between grid steps,
                    # so this axis must NOT be sharded across TensorCores.
                    dimension_semantics=("arbitrary",),
                    vmem_limit_bytes=vmem_limit),
                cost_estimate=cost,
            )(ids_chunk, emb_table)

        out_padded = run_chunked(call_chunk)

    out = out_padded[:n] if out_padded.shape[0] != n else out_padded
    return out.reshape(*orig_shape, d_model)


def make_embedding_table(key, vocab_size, d_model, padding_index):
    """Deterministic synthetic nn.Embedding weights; padding_idx row is zeroed
    (matches PyTorch's padding_idx semantics in the forward pass)."""
    w = jax.random.normal(key, (vocab_size, d_model), dtype=jnp.float32)
    w = w.at[padding_index].set(0.0)
    return w


if __name__ == "__main__":
    key = jax.random.PRNGKey(0)
    k_w, k_x, k_w2, k_x2 = jax.random.split(key, 4)

    batch, seq, d_model, padding_index = 2, 8, 128, 0

    # ---- test 1: small vocab -> VMEM-resident one-hot (MXU) path ----
    vocab_size = 32
    emb_table = make_embedding_table(k_w, vocab_size, d_model, padding_index)
    x = jax.random.randint(k_x, (batch, seq), 0, vocab_size, dtype=jnp.int32)
    x = x.at[0, 0].set(padding_index)          # exercise the zeroed padding row
    out = jax.block_until_ready(word_embedding(x, emb_table))
    ref = emb_table[x] * math.sqrt(d_model)
    assert out.shape == (batch, seq, d_model)
    assert out.dtype == emb_table.dtype
    assert jnp.allclose(out, ref, atol=1e-5, rtol=1e-5)

    # ---- test 2: larger vocab -> VMEM-resident row-gather path ----
    vocab_size2 = 1024
    emb_table2 = make_embedding_table(k_w2, vocab_size2, d_model, padding_index)
    x2 = jax.random.randint(k_x2, (batch, seq), 0, vocab_size2, dtype=jnp.int32)
    out2 = jax.block_until_ready(word_embedding(x2, emb_table2))
    ref2 = emb_table2[x2] * math.sqrt(d_model)
    assert out2.shape == (batch, seq, d_model)
    assert jnp.allclose(out2, ref2, atol=1e-5, rtol=1e-5)

    print("KERNEL_OK")
</pallas_src>

<mosaic_0001>
module attributes {stable_mosaic.version = 11 : i64} {
  func.func @_embed_onehot_kernel(%arg0: i32, %arg1: memref<16x1xi32, #tpu.memory_space<vmem>>, %arg2: memref<32x128xf32, #tpu.memory_space<vmem>>, %arg3: memref<16x128xf32, #tpu.memory_space<vmem>>) attributes {dimension_semantics = [#tpu.dimension_semantics<parallel>], iteration_bounds = array<i64: 1>, scalar_prefetch = 0 : i64, scratch_operands = 0 : i64, tpu.core_type = #tpu.core_type<tc>, window_params = [{transform_indices = @transform_0, window_bounds = array<i64: 16, 1>}, {pipeline_mode = #tpu.pipeline_mode<synchronous>, transform_indices = @transform_1, window_bounds = array<i64: 32, 128>}, {transform_indices = @transform_2, window_bounds = array<i64: 16, 128>}]} {
    %c0 = arith.constant 0 : index
    %c0_0 = arith.constant 0 : index
    %0 = vector.load %arg1[%c0, %c0_0] : memref<16x1xi32, #tpu.memory_space<vmem>>, vector<16x1xi32>
    %c0_i32 = arith.constant 0 : i32
    %c31_i32 = arith.constant 31 : i32
    %1 = vector.broadcast %c0_i32 : i32 to vector<16x1xi32>
    %2 = arith.maxsi %1, %0 : vector<16x1xi32>
    %3 = vector.broadcast %c31_i32 : i32 to vector<16x1xi32>
    %4 = arith.minsi %3, %2 : vector<16x1xi32>
    %5 = tpu.iota {dimensions = array<i32: 1>} : vector<16x32xi32>
    %6 = vector.broadcast %4 : vector<16x1xi32> to vector<16x32xi32>
    %7 = arith.cmpi eq, %6, %5 : vector<16x32xi32>
    %8 = arith.extui %7 : vector<16x32xi1> to vector<16x32xi32>
    %9 = arith.sitofp %8 : vector<16x32xi32> to vector<16x32xf32>
    %c0_1 = arith.constant 0 : index
    %c0_2 = arith.constant 0 : index
    %10 = vector.load %arg2[%c0_1, %c0_2] : memref<32x128xf32, #tpu.memory_space<vmem>>, vector<32x128xf32>
    %cst = arith.constant dense<0.000000e+00> : vector<16x128xf32>
    %11 = tpu.matmul %9, %10, %cst {dimension_numbers = #tpu.dot_dimension_numbers<[1], [0], [0], [1], [0, 0, 1, 1], [], []>} : vector<16x32xf32>, vector<32x128xf32>, vector<16x128xf32> -> vector<16x128xf32>
    %cst_3 = arith.constant 11.3137083 : f32
    %12 = vector.broadcast %cst_3 : f32 to vector<16x128xf32>
    %13 = arith.mulf %11, %12 : vector<16x128xf32>
    %c0_4 = arith.constant 0 : index
    %c0_5 = arith.constant 0 : index
    %14 = vector.load %arg3[%c0_4, %c0_5] : memref<16x128xf32, #tpu.memory_space<vmem>>, vector<16x128xf32>
    tpu.vector_store %arg3[%c0_4, %c0_5], %13 {strides = array<i32>} : memref<16x128xf32, #tpu.memory_space<vmem>>, vector<16x128xf32>,
    return
  }
  func.func @transform_0(%arg0: i32) -> (i32, i32) {
    %c0_i32 = arith.constant 0 : i32
    %c0_i32_0 = arith.constant 0 : i32
    return %arg0, %c0_i32 : i32, i32
  }
  func.func @transform_1(%arg0: i32) -> (i32, i32) {
    %c0_i32 = arith.constant 0 : i32
    %c0_i32_0 = arith.constant 0 : i32
    %c0_i32_1 = arith.constant 0 : i32
    return %c0_i32, %c0_i32_0 : i32, i32
  }
  func.func @transform_2(%arg0: i32) -> (i32, i32) {
    %c0_i32 = arith.constant 0 : i32
    %c0_i32_0 = arith.constant 0 : i32
    return %arg0, %c0_i32 : i32, i32
  }
}

</mosaic_0001>

<llo_original>
// kernel: tpu_custom_call.1
$region0: #{tpu_custom_call.1}
  #allocation0 [shape = 'u32[]', space=smem, size = 0x4, offset = 0x4, fixed_abs, tag = 'smem constant byte address 0x4 - core index']
  #allocation1 [shape = 'u32[144,128]{1,0:T(1,128)}', space=vmem, size = 0x12000, scoped, tag = 'internal scratch']
  %s0 = inlined_call_operand.vmem [shape: s32[16,1], index: 0, kind: input, shape index: {}]
  %s1 = inlined_call_operand.hbm [shape: f32[32,128], index: 1, kind: input, shape index: {}]
  %s2 = inlined_call_operand.hbm [shape: f32[16,128], index: 2, kind: output, shape index: {}]
  %s3 = sld [smem:[#allocation0]]
  $region22: #{tpu_custom_call.1} parent=0
    _
  %s5 = ssub.s32 1, %s3
  %s6 = scalar_select 0, %s5, %s3
  $region1: #{tpu_custom_call.1} parent=0
    #allocation2 [shape = 'u8[16384]{0}', space=vmem, size = 0x4000, scoped, tag = 'input window, operand 1, single buffered']
    #allocation3 [shape = 's32[1]{0}', space=sflag, size = 0x4, scoped, tag = 'scoped memory for tpu_custom_call.1']
    #allocation4 [shape = 's32[1]{0}', space=sflag, size = 0x4, scoped, tag = 'scoped memory for tpu_custom_call.1']
    #allocation5 [shape = 'u8[8192]{0}', space=vmem, size = 0x2000, scoped, tag = 'output window, operand 0, single buffered']
    %7 = vsyncpa [#allocation3], 0
    %8 = vsyncpa [#allocation4], 0
    // Predicated region
    $region2: #{tpu_custom_call.1} parent=1 // pred_check
      _
    $region3: #{tpu_custom_call.1} parent=1 // pred_check_branch
      %10 = sbr.rel (0) target = $region5
    $region4: #{tpu_custom_call.1} parent=1 // pred_region
      _
    $region5: #{tpu_custom_call.1} parent=1 // pred_fallthru
      _
    // Predicated region
    $region6: #{tpu_custom_call.1} parent=1 // pred_check
      _
    $region7: #{tpu_custom_call.1} parent=1 // pred_check_branch
      %12 = sbr.rel (0) target = $region9
    $region8: #{tpu_custom_call.1} parent=1 // pred_region
      %s14 = ssub.s32 512, 512
      %15 = vsyncadd [#allocation3], %s14
      %s16 = sshll.u32 [#allocation2], 4
      %s17 = int_to_ptr.vmem [resolvable:$true] %s16
      %22 = dma.hbm_to_vmem [thread:$0]  %s1, 512, %s17, [#allocation3], 128, 128, 8
    $region9: #{tpu_custom_call.1} parent=1 // pred_fallthru
      _
    // Predicated region
    $region10: #{tpu_custom_call.1} parent=1 // pred_check
      _
    $region11: #{tpu_custom_call.1} parent=1 // pred_check_branch
      %24 = sbr.rel (0) target = $region13
    $region12: #{tpu_custom_call.1} parent=1 // pred_region
      %25 = dma.done [#allocation3], 512
    $region13: #{tpu_custom_call.1} parent=1 // pred_fallthru
      _
    %v26 = vld [vmem:[%s0] sm:$0xff]
    %v27 = vld [vmem:[%s0 + $0x8] sm:$0xff]
    %vm28 = vcmp.gt.s32.totalorder %v26, 0
    %v29 = vsel %vm28, %v26, 0
    %vm30 = vcmp.gt.s32.totalorder %v27, 0
    %v31 = vsel %vm30, %v27, 0
    %vm32 = vcmp.lt.s32.totalorder %v29, 31
    %v33 = vsel %vm32, %v29, 31
    %vm34 = vcmp.lt.s32.totalorder %v31, 31
    %v35 = vsel %vm34, %v31, 31
    %v36 = vlaneseq
    %v37 = vand.u32 %v36, 127
    %38 = vset.pattern.permute.xlu0 0
    %39 = vperm.xlu0 %38, %v33
    %v40 = vpop.permute.xlu0 %39
    %41 = vset.pattern.permute.xlu0 0
    %42 = vperm.xlu0 %41, %v35
    %v43 = vpop.permute.xlu0 %42
    %vm44 = vcmp.eq.s32.totalorder %v40, %v37
    %vm45 = vcmp.eq.s32.totalorder %v43, %v37
    %v46 = vsel %vm44, 1, 0
    %v47 = vsel %vm45, 1, 0
    %v48 = vcvt.s32.f32 %v46
    %v49 = vcvt.s32.f32 %v47
    %v50 = vld [vmem:[#allocation2] sm:$0xff]
    %v51 = vld [vmem:[#allocation2 + $0x8] sm:$0xff]
    %v52 = vld [vmem:[#allocation2 + $0x10] sm:$0xff]
    %v53 = vld [vmem:[#allocation2 + $0x18] sm:$0xff]
    %vm54 = vcmask 261120
    %v56 = vsel %vm54, %v48, 0
    %v59 = vsel %vm54, %v49, 0
    %61 = vmatprep.subr.mxu0 0.0
    %62 = vmatpush1.msra.mxu0 %v50
    %63 = vmatprep.subr.mxu0 0.0
    %64 = vmatpush1.msra.mxu0 %v51
    %65 = vmatprep.subr.mxu0 0.0
    %66 = vmatpush1.msra.mxu0 %v52
    %67 = vmatprep.subr.mxu0 0.0
    %68 = vmatpush1.msra.mxu0 %v53
    %69 = vmatprep.subr.mxu0 0.0
    %70 = vmatpush1.msra.mxu0 0.0
    %71 = vmatprep.subr.mxu0 0.0
    %72 = vmatpush1.msra.mxu0 0.0
    %73 = vmatprep.subr.mxu0 0.0
    %74 = vmatpush1.msra.mxu0 0.0
    %75 = vmatprep.subr.mxu0 0.0
    %76 = vmatpush1.msra.mxu0 0.0
    %77 = vmatprep.subr.mxu0 0.0
    %78 = vmatpush1.msra.mxu0 0.0
    %79 = vmatprep.subr.mxu0 0.0
    %80 = vmatpush1.msra.mxu0 0.0
    %81 = vmatprep.subr.mxu0 0.0
    %82 = vmatpush1.msra.mxu0 0.0
    %83 = vmatprep.subr.mxu0 0.0
    %84 = vmatpush1.msra.mxu0 0.0
    %85 = vmatprep.subr.mxu0 0.0
    %86 = vmatpush1.msra.mxu0 0.0
    %87 = vmatprep.subr.mxu0 0.0
    %88 = vmatpush1.msra.mxu0 0.0
    %89 = vmatprep.subr.mxu0 0.0
    %90 = vmatpush1.msra.mxu0 0.0
    %91 = vmatprep.subr.mxu0 0.0
    %92 = vmatpush1.msra.mxu0 0.0
    %93 = vmatprep.subr.mxu0 0.0
    %94 = vmatpush1.msra.mxu0 0.0
    %95 = vmatprep.subr.mxu0 0.0
    %96 = vmatpush1.msra.mxu0 0.0
    %97 = vmatprep.subr.mxu0 0.0
    %98 = vmatpush1.msra.mxu0 0.0
    %99 = vmatprep.subr.mxu0 0.0
    %100 = vmatpush1.msra.mxu0 0.0
    %101 = vmatprep.subr.mxu0 0.0
    %102 = vmatpush1.msra.mxu0 0.0
    %103 = vmatprep.subr.mxu0 0.0
    %104 = vmatpush1.msra.mxu0 0.0
    %105 = vmatprep.subr.mxu0 0.0
    %106 = vmatpush1.msra.mxu0 0.0
    %107 = vmatprep.subr.mxu0 0.0
    %108 = vmatpush1.msra.mxu0 0.0
    %109 = vmatprep.subr.mxu0 0.0
    %110 = vmatpush1.msra.mxu0 0.0
    %111 = vmatprep.subr.mxu0 0.0
    %112 = vmatpush1.msra.mxu0 0.0
    %113 = vmatprep.subr.mxu0 0.0
    %114 = vmatpush1.msra.mxu0 0.0
    %115 = vmatprep.subr.mxu0 0.0
    %116 = vmatpush1.msra.mxu0 0.0
    %117 = vmatprep.subr.mxu0 0.0
    %118 = vmatpush1.msra.mxu0 0.0
    %119 = vmatprep.subr.mxu0 0.0
    %120 = vmatpush1.msra.mxu0 0.0
    %121 = vmatprep.subr.mxu0 0.0
    %122 = vmatpush1.msra.mxu0 0.0
    %123 = vmatprep.subr.mxu0 0.0
    %124 = vmatpush1.msra.mxu0 0.0
    %125 = vmatprep.mubr.f32.mxu0 0.0
    %126 = vmatmul.mubr.f32.gmra.mrb[0].mxu0 %v56
    %v127 = vpop.f32.mrb[0].mxu0
    %v128 = vadd.f32 0.0, %v127
    %v129 = vpop.f32.mrb[0].mxu0
    %130 = vmatprep.mubr.f32.mxu0 0.0
    %131 = vmatmul.mubr.f32.gmra.mrb[0].mxu0 %v59
    %v132 = vpop.f32.mrb[0].mxu0
    %v133 = vadd.f32 0.0, %v132
    %v134 = vpop.f32.mrb[0].mxu0
    %135 = vdwg.mxu0
    %v136 = vmul.f32 %v128, 11.313708
    %v137 = vmul.f32 %v133, 11.313708
    %138 = vst [vmem:[#allocation5] sm:$0xff] %v136
    %139 = vst [vmem:[#allocation5 + $0x8] sm:$0xff] %v137
    // Predicated region
    $region14: #{tpu_custom_call.1} parent=1 // pred_check
      _
    $region15: #{tpu_custom_call.1} parent=1 // pred_check_branch
      %141 = sbr.rel (0) target = $region17
    $region16: #{tpu_custom_call.1} parent=1 // pred_region
      %s143 = ssub.s32 256, 256
      %144 = vsyncadd [#allocation4], %s143
      %s145 = sshll.u32 [#allocation5], 4
      %s146 = int_to_ptr.vmem [resolvable:$true] %s145
      %151 = dma.vmem_to_hbm [thread:$0]  %s146, 256, %s2, [#allocation4], 128, 128, 8
    $region17: #{tpu_custom_call.1} parent=1 // pred_fallthru
      _
    // Predicated region
    $region18: #{tpu_custom_call.1} parent=1 // pred_check
      _
    $region19: #{tpu_custom_call.1} parent=1 // pred_check_branch
      %153 = sbr.rel (0) target = $region21
    $region20: #{tpu_custom_call.1} parent=1 // pred_region
      %154 = dma.done [#allocation4], 256
    $region21: #{tpu_custom_call.1} parent=1 // pred_fallthru
      _
    %155 = vsyncpa [#allocation3], 1
    %156 = vsyncpa [#allocation4], 1

</llo_original>
